<compile_context>
chip_gen: v7x
topology: tpu7x:2x2x1
jax: 0.10.0
libtpu: 0.0.40
codegen_flags: <defaults>
</compile_context>

<pallas_src>
import jax
import jax.numpy as jnp
import numpy as np
from jax.experimental import pallas as pl
from jax.experimental.pallas import tpu as pltpu

_LANE = 512        # lanes per row (multiple of 128) -> lane-dense loads/stores
_TR = 512          # target sublane rows per block  -> 512*512*4B = 1 MiB f32 blocks


def _layout(batch: int):
    """Return (padded_batch, rows, rows_per_block, grid) for a lane-dense layout."""
    chunk = _TR * _LANE
    if batch <= chunk:
        # Single block: block shape == full array dims (always legal).
        padded = pl.cdiv(batch, _LANE) * _LANE
        rows = padded // _LANE
        return padded, rows, rows, 1
    padded = pl.cdiv(batch, chunk) * chunk
    rows = padded // _LANE
    return padded, rows, _TR, rows // _TR


def _make_kernel(w1_np: np.ndarray, w2_np: np.ndarray):
    """Pure-VPU kernel with the tiny constant weights baked in at trace time.

    w1_np: (H, 1) -- linear.weight   (hidden_h = x * W1[h, 0])
    w2_np: (O, H) -- linear2.weight  (y_o = sum_h relu(hidden_h) * W2[o, h])
    """
    H, IN = w1_np.shape
    assert IN == 1, "module fixes linear.weight to shape (2, 1) => in_size must be 1"
    O, H2 = w2_np.shape
    assert H2 == H
    w1 = [float(w1_np[h, 0]) for h in range(H)]
    w2 = [[float(w2_np[o, h]) for h in range(H)] for o in range(O)]

    def kernel(x_ref, out_ref):
        # x_ref: (tr, LANE) lane-dense slab; out_ref: (O, tr, LANE).
        x = x_ref[...].astype(jnp.float32)
        acts = [jnp.maximum(x * w1[h], 0.0) for h in range(H)]   # full-width VPU ops
        for o in range(O):
            y = acts[0] * w2[o][0]
            for h in range(1, H):
                y = y + acts[h] * w2[o][h]
            out_ref[o, :, :] = y.astype(out_ref.dtype)           # unmasked full-vreg store

    return kernel, H, O


def make_nn_forward(w1, w2):
    """Build the forward fn once (weights baked here, outside the hot path)."""
    w1_np = np.asarray(w1, dtype=np.float32)
    w2_np = np.asarray(w2, dtype=np.float32)
    kernel, _, O = _make_kernel(w1_np, w2_np)

    def forward(x):
        B, IN = x.shape
        assert IN == 1
        padded, rows, tr, grid = _layout(B)

        xf = x.reshape(B)
        if padded != B:
            xf = jnp.pad(xf, (0, padded - B))
        xs = xf.reshape(rows, _LANE)

        out = pl.pallas_call(
            kernel,
            out_shape=jax.ShapeDtypeStruct((O, rows, _LANE), x.dtype),
            grid=(grid,),
            in_specs=[pl.BlockSpec((tr, _LANE), lambda i: (i, 0))],
            out_specs=pl.BlockSpec((O, tr, _LANE), lambda i: (0, i, 0)),
            compiler_params=pltpu.CompilerParams(
                dimension_semantics=("parallel",),   # shard batch rows across TCs (v7x)
            ),
        )(xs)

        # (O, rows, LANE) -> (O, padded) -> (O, B) -> (B, O)
        return out.reshape(O, padded)[:, :B].T

    return jax.jit(forward)


if __name__ == "__main__":
    # Deterministic parameters exactly as in the PyTorch __init__.
    w1 = jnp.array([[1.0], [1.0]], dtype=jnp.float32)            # linear.weight  (2, 1)
    w2 = jnp.array([[1.0, 1.0], [1.0, 1.0]], dtype=jnp.float32)  # linear2.weight (2, 2)

    nn_forward = make_nn_forward(w1, w2)

    # Small input consistent with in_size=1: batch=8, features=1.
    key = jax.random.PRNGKey(0)
    x = jax.random.normal(key, (8, 1), dtype=jnp.float32)

    y = jax.block_until_ready(nn_forward(x))

    # Reference check in plain JAX (module returns the pre-relu2 value y).
    # TODO(synk): the torch forward's print(act)/print(y) debug side effects are not reproduced.
    ref = jnp.maximum(x @ w1.T, 0.0) @ w2.T
    assert y.shape == (8, 2), y.shape
    assert jnp.allclose(y, ref, atol=1e-6), (y, ref)

    print("KERNEL_OK")
</pallas_src>

<mosaic_0001>
module attributes {stable_mosaic.version = 11 : i64} {
  func.func @kernel(%arg0: i32, %arg1: memref<1x512xf32, #tpu.memory_space<vmem>>, %arg2: memref<2x1x512xf32, #tpu.memory_space<vmem>>) attributes {dimension_semantics = [#tpu.dimension_semantics<parallel>], iteration_bounds = array<i64: 1>, scalar_prefetch = 0 : i64, scratch_operands = 0 : i64, tpu.core_type = #tpu.core_type<tc>, window_params = [{transform_indices = @transform_0, window_bounds = array<i64: 1, 512>}, {transform_indices = @transform_1, window_bounds = array<i64: 2, 1, 512>}]} {
    %c0 = arith.constant 0 : index
    %c0_0 = arith.constant 0 : index
    %0 = vector.load %arg1[%c0, %c0_0] : memref<1x512xf32, #tpu.memory_space<vmem>>, vector<1x512xf32>
    %cst = arith.constant 1.000000e+00 : f32
    %1 = vector.broadcast %cst : f32 to vector<1x512xf32>
    %2 = arith.mulf %0, %1 : vector<1x512xf32>
    %cst_1 = arith.constant 0.000000e+00 : f32
    %3 = vector.broadcast %cst_1 : f32 to vector<1x512xf32>
    %4 = arith.maximumf %2, %3 : vector<1x512xf32>
    %cst_2 = arith.constant 1.000000e+00 : f32
    %5 = vector.broadcast %cst_2 : f32 to vector<1x512xf32>
    %6 = arith.mulf %0, %5 : vector<1x512xf32>
    %cst_3 = arith.constant 0.000000e+00 : f32
    %7 = vector.broadcast %cst_3 : f32 to vector<1x512xf32>
    %8 = arith.maximumf %6, %7 : vector<1x512xf32>
    %cst_4 = arith.constant 1.000000e+00 : f32
    %9 = vector.broadcast %cst_4 : f32 to vector<1x512xf32>
    %10 = arith.mulf %4, %9 : vector<1x512xf32>
    %cst_5 = arith.constant 1.000000e+00 : f32
    %11 = vector.broadcast %cst_5 : f32 to vector<1x512xf32>
    %12 = arith.mulf %8, %11 : vector<1x512xf32>
    %13 = arith.addf %10, %12 : vector<1x512xf32>
    %c0_6 = arith.constant 0 : index
    %c0_7 = arith.constant 0 : index
    %c0_8 = arith.constant 0 : index
    %14 = vector.load %arg2[%c0_6, %c0_7, %c0_8] : memref<2x1x512xf32, #tpu.memory_space<vmem>>, vector<1x1x512xf32>
    %15 = vector.shape_cast %14 : vector<1x1x512xf32> to vector<1x512xf32>
    %16 = vector.shape_cast %13 : vector<1x512xf32> to vector<1x1x512xf32>
    tpu.vector_store %arg2[%c0_6, %c0_7, %c0_8], %16 {strides = array<i32>} : memref<2x1x512xf32, #tpu.memory_space<vmem>>, vector<1x1x512xf32>,
    %cst_9 = arith.constant 1.000000e+00 : f32
    %17 = vector.broadcast %cst_9 : f32 to vector<1x512xf32>
    %18 = arith.mulf %4, %17 : vector<1x512xf32>
    %cst_10 = arith.constant 1.000000e+00 : f32
    %19 = vector.broadcast %cst_10 : f32 to vector<1x512xf32>
    %20 = arith.mulf %8, %19 : vector<1x512xf32>
    %21 = arith.addf %18, %20 : vector<1x512xf32>
    %c1 = arith.constant 1 : index
    %c0_11 = arith.constant 0 : index
    %c0_12 = arith.constant 0 : index
    %22 = vector.load %arg2[%c1, %c0_11, %c0_12] : memref<2x1x512xf32, #tpu.memory_space<vmem>>, vector<1x1x512xf32>
    %23 = vector.shape_cast %22 : vector<1x1x512xf32> to vector<1x512xf32>
    %24 = vector.shape_cast %21 : vector<1x512xf32> to vector<1x1x512xf32>
    tpu.vector_store %arg2[%c1, %c0_11, %c0_12], %24 {strides = array<i32>} : memref<2x1x512xf32, #tpu.memory_space<vmem>>, vector<1x1x512xf32>,
    return
  }
  func.func @transform_0(%arg0: i32) -> (i32, i32) {
    %c0_i32 = arith.constant 0 : i32
    %c0_i32_0 = arith.constant 0 : i32
    return %arg0, %c0_i32 : i32, i32
  }
  func.func @transform_1(%arg0: i32) -> (i32, i32, i32) {
    %c0_i32 = arith.constant 0 : i32
    %c0_i32_0 = arith.constant 0 : i32
    %c0_i32_1 = arith.constant 0 : i32
    return %c0_i32, %arg0, %c0_i32_0 : i32, i32, i32
  }
}

</mosaic_0001>

<llo_original>
// kernel: forward.1
$region0: #{forward.1}
  #allocation0 [shape = 'u32[]', space=smem, size = 0x4, offset = 0x4, fixed_abs, tag = 'smem constant byte address 0x4 - core index']
  #allocation1 [shape = 'u32[144,128]{1,0:T(1,128)}', space=vmem, size = 0x12000, scoped, tag = 'internal scratch']
  %s0 = inlined_call_operand.vmem [shape: f32[1,512], index: 0, kind: input, shape index: {}]
  %s1 = inlined_call_operand.vmem [shape: f32[2,1,512], index: 1, kind: output, shape index: {}]
  %s2 = sld [smem:[#allocation0]]
  $region14: #{forward.1} parent=0
    _
  %s4 = ssub.s32 1, %s2
  %s5 = scalar_select 0, %s4, %s2
  // Predicated region
  $region2: #{forward.1} parent=0 // pred_check
    _
  $region3: #{forward.1} parent=0 // pred_check_branch
    %7 = sbr.rel (0) target = $region5
  $region4: #{forward.1} parent=0 // pred_region
    _
  $region5: #{forward.1} parent=0 // pred_fallthru
    _
  %v8 = vld [vmem:[%s0] sm:$0xf]
  %v9 = vmax.f32 %v8, 0.0
  %v10 = vadd.f32 %v9, %v9
  %v11 = vlaneseq
  %vm12 = vcmp.ge.s32.totalorder %v11, 0
  %vm13 = vcmp.lt.s32.totalorder %v11, 512
  %vm14 = vmand %vm12, %vm13
  %15 = vst.msk [vmem:[%s1] sm:$0xf] %vm14, %v10
  %s16 = scalar_lea.vmem %s1, 4
  %17 = vst.msk [vmem:[%s16] sm:$0xf] %vm14, %v10
  // Predicated region
  $region6: #{forward.1} parent=0 // pred_check
    _
  $region7: #{forward.1} parent=0 // pred_check_branch
    %19 = sbr.rel (0) target = $region9
  $region8: #{forward.1} parent=0 // pred_region
    _
  $region9: #{forward.1} parent=0 // pred_fallthru
    _
  // Predicated region
  $region10: #{forward.1} parent=0 // pred_check
    _
  $region11: #{forward.1} parent=0 // pred_check_branch
    %21 = sbr.rel (0) target = $region13
  $region12: #{forward.1} parent=0 // pred_region
    _
  $region13: #{forward.1} parent=0 // pred_fallthru
    _

</llo_original>
